<compile_context>
chip_gen: v7x
topology: tpu7x:2x2x1
jax: 0.10.0
libtpu: 0.0.40
codegen_flags: <defaults>
</compile_context>

<pallas_src>
import functools

import jax
import jax.numpy as jnp
from jax.experimental import pallas as pl
from jax.experimental.pallas import tpu as pltpu

LANE = 128
NEG_BIG = -1.0e30  # finite "-inf" stand-in for padded softmax columns


def _round_up(x, m):
    return (x + m - 1) // m * m


def fc_kernel(x_ref, w1_ref, b1_ref, w2_ref, b2_ref, o_ref, *, no_actions):
    # layer1: Linear(no_obv, 128) + ReLU   (bf16 MXU inputs, f32 accumulate)
    h = jnp.dot(x_ref[...], w1_ref[...],
                preferred_element_type=jnp.float32) + b1_ref[...]
    h = jnp.maximum(h, 0.0)
    # TODO(synk): nn.Dropout(0.1) is identity in eval mode; training-mode
    # masking/scaling is not implemented here.
    # out: Linear(128, n_pad). Padded cols have w2 == 0 and b2 == -1e30, so
    # exp(pad - max) underflows to exactly 0 and the softmax is unperturbed.
    logits = jnp.dot(h.astype(jnp.bfloat16), w2_ref[...],
                     preferred_element_type=jnp.float32) + b2_ref[...]
    m = jnp.max(logits, axis=-1, keepdims=True)
    e = jnp.exp(logits - m)
    denom = jnp.sum(e, axis=-1, keepdims=True)
    probs = e / denom                      # exact divide: rows sum to 1
    # store only the real columns -> narrow, true-width output block
    o_ref[...] = probs[:, :no_actions]


def prepare_params(w1, b1, w2, b2):
    """One-time weight prep (hoisted out of the per-call path): cast matmul
    weights to bf16 and pad w2/b2 out to a 128-lane multiple."""
    no_actions = w2.shape[1]
    n_pad = _round_up(no_actions, LANE)
    w1b = w1.astype(jnp.bfloat16)
    w2p = jnp.pad(w2, ((0, 0), (0, n_pad - no_actions))).astype(jnp.bfloat16)
    b2p = jnp.pad(b2.astype(jnp.float32), ((0, 0), (0, n_pad - no_actions)),
                  constant_values=NEG_BIG)
    return w1b, b1.astype(jnp.float32), w2p, b2p, no_actions


def fc_forward(x, params, *, tile_b=1024):
    """x: (B, no_obv); params from prepare_params -> (B, no_actions) f32."""
    w1b, b1, w2p, b2p, no_actions = params
    B, no_obv = x.shape
    hidden = w1b.shape[1]
    n_pad = w2p.shape[1]

    # bf16 activations: halves the dominant x HBM read.
    xb = x.astype(jnp.bfloat16)

    # ---- batch tile selection ----
    # multiple of 8 sublanes; keep >= 2 grid steps so the "parallel" batch
    # axis can shard across both TensorCores on v7x.
    tile_b = min(tile_b, _round_up(pl.cdiv(B, 2), 8))
    tile_b = _round_up(max(tile_b, 8), 8)

    # VMEM-budget guard (v7x: 64 MiB physical / 32 MiB default scoped).
    def _vmem_bytes(tb):
        return (2 * tb * no_obv * 2            # x blocks (bf16, double-buffered)
                + 2 * tb * no_actions * 4      # out blocks (f32, double-buffered)
                + no_obv * hidden * 2          # w1 (bf16, resident)
                + hidden * n_pad * 2           # w2 (bf16, resident)
                + (hidden + n_pad) * 4         # biases (f32, resident)
                + 3 * tb * n_pad * 4)          # h / logits / probs f32 temporaries

    while _vmem_bytes(tile_b) > 48 * 1024 * 1024 and tile_b > 8:
        tile_b = max(8, _round_up(tile_b // 2, 8))

    grid = (pl.cdiv(B, tile_b),)

    cp_kwargs = dict(dimension_semantics=("parallel",))
    needed = _vmem_bytes(tile_b) + (4 << 20)
    if needed > (16 << 20):                    # above conservative default scoped VMEM
        cp_kwargs["vmem_limit_bytes"] = int(min(needed, 60 << 20))

    out = pl.pallas_call(
        functools.partial(fc_kernel, no_actions=no_actions),
        out_shape=jax.ShapeDtypeStruct((B, no_actions), jnp.float32),
        grid_spec=pltpu.PrefetchScalarGridSpec(
            num_scalar_prefetch=0,
            grid=grid,
            in_specs=[
                pl.BlockSpec((tile_b, no_obv), lambda i: (i, 0)),  # x: batch-tiled
                pl.BlockSpec((no_obv, hidden), lambda i: (0, 0)),  # w1: resident
                pl.BlockSpec((1, hidden), lambda i: (0, 0)),       # b1: resident
                pl.BlockSpec((hidden, n_pad), lambda i: (0, 0)),   # w2 (padded): resident
                pl.BlockSpec((1, n_pad), lambda i: (0, 0)),        # b2 (padded): resident
            ],
            # true-width output block: last dim == full array dim (legal), so
            # the writeback is 4*no_actions bytes/row instead of 512.
            out_specs=pl.BlockSpec((tile_b, no_actions), lambda i: (i, 0)),
        ),
        compiler_params=pltpu.CompilerParams(**cp_kwargs),
    )(xb, w1b, b1, w2p, b2p)

    return out


def init_params(key, no_obv, no_actions, hidden=128):
    """PyTorch-style Linear init: U(-1/sqrt(fan_in), 1/sqrt(fan_in))."""
    k1, k2, k3, k4 = jax.random.split(key, 4)
    bound1 = 1.0 / jnp.sqrt(no_obv)
    bound2 = 1.0 / jnp.sqrt(hidden)
    w1 = jax.random.uniform(k1, (no_obv, hidden), jnp.float32, -bound1, bound1)
    b1 = jax.random.uniform(k2, (1, hidden), jnp.float32, -bound1, bound1)
    w2 = jax.random.uniform(k3, (hidden, no_actions), jnp.float32, -bound2, bound2)
    b2 = jax.random.uniform(k4, (1, no_actions), jnp.float32, -bound2, bound2)
    return w1, b1, w2, b2


if __name__ == "__main__":
    key = jax.random.PRNGKey(0)
    B, no_obv, no_actions = 64, 32, 8
    kx, kp = jax.random.split(key)
    x = jax.random.normal(kx, (B, no_obv), jnp.float32)
    w1, b1, w2, b2 = init_params(kp, no_obv, no_actions)
    params = prepare_params(w1, b1, w2, b2)

    # tile_b=16 -> 4 pipelined grid steps even at this small demo batch.
    out = jax.block_until_ready(fc_forward(x, params, tile_b=16))

    # reference with matched numerics (bf16 matmul inputs, f32 accumulate)
    xb = x.astype(jnp.bfloat16)
    h_ref = jnp.maximum(
        jnp.dot(xb, w1.astype(jnp.bfloat16),
                preferred_element_type=jnp.float32) + b1, 0.0)
    logits_ref = jnp.dot(h_ref.astype(jnp.bfloat16), w2.astype(jnp.bfloat16),
                         preferred_element_type=jnp.float32) + b2
    ref = jax.nn.softmax(logits_ref, axis=-1)
    # pure-f32 reference (original module numerics) as a looser sanity check
    ref_f32 = jax.nn.softmax(jnp.maximum(x @ w1 + b1, 0.0) @ w2 + b2, axis=-1)

    assert out.shape == (B, no_actions)
    assert jnp.allclose(out, ref, atol=2e-3, rtol=2e-3), \
        f"max abs err vs matched ref: {jnp.max(jnp.abs(out - ref))}"
    assert jnp.allclose(out, ref_f32, atol=3e-2, rtol=3e-2)
    assert jnp.allclose(jnp.sum(out, axis=-1), 1.0, atol=1e-3)
    print("KERNEL_OK")
</pallas_src>

<mosaic_0001>
module attributes {stable_mosaic.version = 11 : i64} {
  func.func @fc_kernel(%arg0: i32, %arg1: memref<16x32xbf16, #tpu.memory_space<vmem>>, %arg2: memref<32x128xbf16, #tpu.memory_space<vmem>>, %arg3: memref<1x128xf32, #tpu.memory_space<vmem>>, %arg4: memref<128x128xbf16, #tpu.memory_space<vmem>>, %arg5: memref<1x128xf32, #tpu.memory_space<vmem>>, %arg6: memref<16x8xf32, #tpu.memory_space<vmem>>) attributes {dimension_semantics = [#tpu.dimension_semantics<parallel>], iteration_bounds = array<i64: 4>, scalar_prefetch = 0 : i64, scratch_operands = 0 : i64, tpu.core_type = #tpu.core_type<tc>, window_params = [{transform_indices = @transform_0, window_bounds = array<i64: 16, 32>}, {pipeline_mode = #tpu.pipeline_mode<synchronous>, transform_indices = @transform_1, window_bounds = array<i64: 32, 128>}, {pipeline_mode = #tpu.pipeline_mode<synchronous>, transform_indices = @transform_2, window_bounds = array<i64: 1, 128>}, {pipeline_mode = #tpu.pipeline_mode<synchronous>, transform_indices = @transform_3, window_bounds = array<i64: 128, 128>}, {pipeline_mode = #tpu.pipeline_mode<synchronous>, transform_indices = @transform_4, window_bounds = array<i64: 1, 128>}, {transform_indices = @transform_5, window_bounds = array<i64: 16, 8>}]} {
    %c0 = arith.constant 0 : index
    %c0_0 = arith.constant 0 : index
    %0 = vector.load %arg1[%c0, %c0_0] : memref<16x32xbf16, #tpu.memory_space<vmem>>, vector<16x32xbf16>
    %c0_1 = arith.constant 0 : index
    %c0_2 = arith.constant 0 : index
    %1 = vector.load %arg2[%c0_1, %c0_2] : memref<32x128xbf16, #tpu.memory_space<vmem>>, vector<32x128xbf16>
    %cst = arith.constant dense<0.000000e+00> : vector<16x128xf32>
    %2 = tpu.matmul %0, %1, %cst {dimension_numbers = #tpu.dot_dimension_numbers<[1], [0], [0], [1], [0, 0, 1, 1], [], []>} : vector<16x32xbf16>, vector<32x128xbf16>, vector<16x128xf32> -> vector<16x128xf32>
    %c0_3 = arith.constant 0 : index
    %c0_4 = arith.constant 0 : index
    %3 = vector.load %arg3[%c0_3, %c0_4] : memref<1x128xf32, #tpu.memory_space<vmem>>, vector<1x128xf32>
    %4 = vector.broadcast %3 : vector<1x128xf32> to vector<16x128xf32>
    %5 = arith.addf %2, %4 : vector<16x128xf32>
    %cst_5 = arith.constant 0.000000e+00 : f32
    %6 = vector.broadcast %cst_5 : f32 to vector<16x128xf32>
    %7 = arith.maximumf %5, %6 : vector<16x128xf32>
    %8 = arith.truncf %7 : vector<16x128xf32> to vector<16x128xbf16>
    %c0_6 = arith.constant 0 : index
    %c0_7 = arith.constant 0 : index
    %9 = vector.load %arg4[%c0_6, %c0_7] : memref<128x128xbf16, #tpu.memory_space<vmem>>, vector<128x128xbf16>
    %cst_8 = arith.constant dense<0.000000e+00> : vector<16x128xf32>
    %10 = tpu.matmul %8, %9, %cst_8 {dimension_numbers = #tpu.dot_dimension_numbers<[1], [0], [0], [1], [0, 0, 1, 1], [], []>} : vector<16x128xbf16>, vector<128x128xbf16>, vector<16x128xf32> -> vector<16x128xf32>
    %c0_9 = arith.constant 0 : index
    %c0_10 = arith.constant 0 : index
    %11 = vector.load %arg5[%c0_9, %c0_10] : memref<1x128xf32, #tpu.memory_space<vmem>>, vector<1x128xf32>
    %12 = vector.broadcast %11 : vector<1x128xf32> to vector<16x128xf32>
    %13 = arith.addf %10, %12 : vector<16x128xf32>
    %cst_11 = arith.constant dense<0xFF800000> : vector<16xf32>
    %14 = vector.multi_reduction <maximumf>, %13, %cst_11 [1] : vector<16x128xf32> to vector<16xf32>
    %15 = vector.shape_cast %14 : vector<16xf32> to vector<16x1xf32>
    %16 = vector.broadcast %15 : vector<16x1xf32> to vector<16x128xf32>
    %17 = arith.subf %13, %16 : vector<16x128xf32>
    %18 = math.exp %17 : vector<16x128xf32>
    %cst_12 = arith.constant dense<0.000000e+00> : vector<16xf32>
    %19 = vector.multi_reduction <add>, %18, %cst_12 [1] : vector<16x128xf32> to vector<16xf32>
    %20 = vector.shape_cast %19 : vector<16xf32> to vector<16x1xf32>
    %21 = vector.broadcast %20 : vector<16x1xf32> to vector<16x128xf32>
    %22 = arith.divf %18, %21 : vector<16x128xf32>
    %23 = vector.extract_strided_slice %22 {offsets = [0, 0], sizes = [16, 8], strides = [1, 1]} : vector<16x128xf32> to vector<16x8xf32>
    %c0_13 = arith.constant 0 : index
    %c0_14 = arith.constant 0 : index
    %24 = vector.load %arg6[%c0_13, %c0_14] : memref<16x8xf32, #tpu.memory_space<vmem>>, vector<16x8xf32>
    tpu.vector_store %arg6[%c0_13, %c0_14], %23 {strides = array<i32>} : memref<16x8xf32, #tpu.memory_space<vmem>>, vector<16x8xf32>,
    return
  }
  func.func @transform_0(%arg0: i32) -> (i32, i32) {
    %c0_i32 = arith.constant 0 : i32
    %c0_i32_0 = arith.constant 0 : i32
    return %arg0, %c0_i32 : i32, i32
  }
  func.func @transform_1(%arg0: i32) -> (i32, i32) {
    %c0_i32 = arith.constant 0 : i32
    %c0_i32_0 = arith.constant 0 : i32
    %c0_i32_1 = arith.constant 0 : i32
    return %c0_i32, %c0_i32_0 : i32, i32
  }
  func.func @transform_2(%arg0: i32) -> (i32, i32) {
    %c0_i32 = arith.constant 0 : i32
    %c0_i32_0 = arith.constant 0 : i32
    %c0_i32_1 = arith.constant 0 : i32
    return %c0_i32, %c0_i32_0 : i32, i32
  }
  func.func @transform_3(%arg0: i32) -> (i32, i32) {
    %c0_i32 = arith.constant 0 : i32
    %c0_i32_0 = arith.constant 0 : i32
    %c0_i32_1 = arith.constant 0 : i32
    return %c0_i32, %c0_i32_0 : i32, i32
  }
  func.func @transform_4(%arg0: i32) -> (i32, i32) {
    %c0_i32 = arith.constant 0 : i32
    %c0_i32_0 = arith.constant 0 : i32
    %c0_i32_1 = arith.constant 0 : i32
    return %c0_i32, %c0_i32_0 : i32, i32
  }
  func.func @transform_5(%arg0: i32) -> (i32, i32) {
    %c0_i32 = arith.constant 0 : i32
    %c0_i32_0 = arith.constant 0 : i32
    return %arg0, %c0_i32 : i32, i32
  }
}

</mosaic_0001>

<llo_original>
// kernel: tpu_custom_call.1
$region0: #{tpu_custom_call.1}
  #allocation0 [shape = 'u32[]', space=smem, size = 0x4, offset = 0x4, fixed_abs, tag = 'smem constant byte address 0x4 - core index']
  #allocation1 [shape = 'u32[144,128]{1,0:T(1,128)}', space=vmem, size = 0x12000, scoped, tag = 'internal scratch']
  %s0 = inlined_call_operand.vmem [shape: bf16[64,32], index: 0, kind: input, shape index: {}]
  %s1 = inlined_call_operand.vmem [shape: bf16[32,128], index: 1, kind: input, shape index: {}]
  %s2 = inlined_call_operand.vmem [shape: f32[1,128], index: 2, kind: input, shape index: {}]
  %s3 = inlined_call_operand.hbm [shape: bf16[128,128], index: 3, kind: input, shape index: {}]
  %s4 = inlined_call_operand.vmem [shape: f32[1,128], index: 4, kind: input, shape index: {}]
  %s5 = inlined_call_operand.vmem [shape: f32[64,8], index: 5, kind: output, shape index: {}]
  %s6 = sld [smem:[#allocation0]]
  $region57: #{tpu_custom_call.1} parent=0
    _
  %s8 = ssub.s32 1, %s6
  %s9 = scalar_select 0, %s8, %s6
  $region1: #{tpu_custom_call.1} parent=0
    #allocation2 [shape = 'u8[32768]{0}', space=vmem, size = 0x8000, scoped, tag = 'input window, operand 3, single buffered']
    #allocation3 [shape = 's32[2]{0}', space=sflag, size = 0x8, scoped, tag = 'scoped memory for tpu_custom_call.1']
    %10 = vsyncpa [#allocation3], 0
    loop: start=0, step=1, limit=6
    $region2: #{tpu_custom_call.1} parent=1 // loop_pre_header
      _
    $region3: #{tpu_custom_call.1} parent=1 // loop_header
      %s12 = sphi 0, %s16
      %p13 = scmp.ge.s32.totalorder %s12, 6
      %s22 = sphi 0, %s24
      %s25 = sphi 0, %s22
      %s26 = sphi 0, %s25
      %s42 = sphi 0, %s26
      %s46 = sphi 0, %s46
      %s48 = sphi 0, %s46
      %s49 = sphi 0, %s48
      %s63 = sphi 0, %s49
      %s67 = sphi 0, %s67
      %s69 = sphi 0, %s67
      %s70 = sphi 0, %s69
      %s84 = sphi 0, %s70
      %s88 = sphi 0, %s88
      %s90 = sphi 0, %s88
      %s91 = sphi 0, %s90
      %s105 = sphi 0, %s91
      %s109 = sphi 0, %s109
      %s111 = sphi 0, %s109
      %s112 = sphi 0, %s111
      %s126 = sphi 0, %s112
      %s132 = sphi 0, %s134
      %s135 = sphi 0, %s132
      %s136 = sphi 0, %s135
      %s152 = sphi 0, %s136
    $region4: #{tpu_custom_call.1} parent=1 // loop_header_branch
      %15 = sbr.rel (%p13) target = $region8
    $region5: #{tpu_custom_call.1} parent=1 // loop_body
      %s17 = ssub.s32 %s12, 1
      %s18 = ssub.s32 %s12, 2
      %s19 = sadd.s32 %s12, 1
      %s20 = ssub.s32 %s12, %s19
      %p21 = scmp.eq.s32.totalorder %s20, 0
      %s23 = sadd.s32 %s22, 1
      %s24 = scalar_select %p21, %s22, %s23
      %p27 = pneg %p21
      %p28 = scmp.eq.s32.totalorder %s12, 3
      %p29 = por %p27, %p28
      %p30 = scmp.ne.s32.totalorder %s22, %s25
      %p31 = scmp.eq.s32.totalorder %s12, 0
      %p32 = por %p30, %p31
      %p33 = scmp.ne.s32.totalorder %s22, %s25
      %p34 = scmp.eq.s32.totalorder %s17, 3
      %p35 = por %p33, %p34
      %p36 = scmp.ne.s32.totalorder %s25, %s26
      %p37 = scmp.eq.s32.totalorder %s17, 0
      %p38 = por %p36, %p37
      %p39 = scmp.ne.s32.totalorder %s25, %s26
      %p40 = scmp.eq.s32.totalorder %s18, 3
      %p41 = por %p39, %p40
      %p43 = scmp.ne.s32.totalorder %s26, %s42
      %p44 = scmp.eq.s32.totalorder %s18, 0
      %p45 = por %p43, %p44
      %s47 = sadd.s32 %s46, 1
      %p50 = scmp.eq.s32.totalorder %s12, 3
      %p51 = scmp.ne.s32.totalorder %s46, %s48
      %p52 = scmp.eq.s32.totalorder %s12, 0
      %p53 = por %p51, %p52
      %p54 = scmp.ne.s32.totalorder %s46, %s48
      %p55 = scmp.eq.s32.totalorder %s17, 3
      %p56 = por %p54, %p55
      %p57 = scmp.ne.s32.totalorder %s48, %s49
      %p58 = scmp.eq.s32.totalorder %s17, 0
      %p59 = por %p57, %p58
      %p60 = scmp.ne.s32.totalorder %s48, %s49
      %p61 = scmp.eq.s32.totalorder %s18, 3
      %p62 = por %p60, %p61
      %p64 = scmp.ne.s32.totalorder %s49, %s63
      %p65 = scmp.eq.s32.totalorder %s18, 0
      %p66 = por %p64, %p65
      %s68 = sadd.s32 %s67, 1
      %p71 = scmp.eq.s32.totalorder %s12, 3
      %p72 = scmp.ne.s32.totalorder %s67, %s69
      %p73 = scmp.eq.s32.totalorder %s12, 0
      %p74 = por %p72, %p73
      %p75 = scmp.ne.s32.totalorder %s67, %s69
      %p76 = scmp.eq.s32.totalorder %s17, 3
      %p77 = por %p75, %p76
      %p78 = scmp.ne.s32.totalorder %s69, %s70
      %p79 = scmp.eq.s32.totalorder %s17, 0
      %p80 = por %p78, %p79
      %p81 = scmp.ne.s32.totalorder %s69, %s70
      %p82 = scmp.eq.s32.totalorder %s18, 3
      %p83 = por %p81, %p82
      %p85 = scmp.ne.s32.totalorder %s70, %s84
      %p86 = scmp.eq.s32.totalorder %s18, 0
      %p87 = por %p85, %p86
      %s89 = sadd.s32 %s88, 1
      %p92 = scmp.eq.s32.totalorder %s12, 3
      %p93 = scmp.ne.s32.totalorder %s88, %s90
      %p94 = scmp.eq.s32.totalorder %s12, 0
      %p95 = por %p93, %p94
      %p96 = scmp.ne.s32.totalorder %s88, %s90
      %p97 = scmp.eq.s32.totalorder %s17, 3
      %p98 = por %p96, %p97
      %p99 = scmp.ne.s32.totalorder %s90, %s91
      %p100 = scmp.eq.s32.totalorder %s17, 0
      %p101 = por %p99, %p100
      %p102 = scmp.ne.s32.totalorder %s90, %s91
      %p103 = scmp.eq.s32.totalorder %s18, 3
      %p104 = por %p102, %p103
      %p106 = scmp.ne.s32.totalorder %s91, %s105
      %p107 = scmp.eq.s32.totalorder %s18, 0
      %p108 = por %p106, %p107
      %s110 = sadd.s32 %s109, 1
      %p113 = scmp.eq.s32.totalorder %s12, 3
      %p114 = scmp.ne.s32.totalorder %s109, %s111
      %p115 = scmp.eq.s32.totalorder %s12, 0
      %p116 = por %p114, %p115
      %p117 = scmp.ne.s32.totalorder %s109, %s111
      %p118 = scmp.eq.s32.totalorder %s17, 3
      %p119 = por %p117, %p118
      %p120 = scmp.ne.s32.totalorder %s111, %s112
      %p121 = scmp.eq.s32.totalorder %s17, 0
      %p122 = por %p120, %p121
      %p123 = scmp.ne.s32.totalorder %s111, %s112
      %p124 = scmp.eq.s32.totalorder %s18, 3
      %p125 = por %p123, %p124
      %p127 = scmp.ne.s32.totalorder %s112, %s126
      %p128 = scmp.eq.s32.totalorder %s18, 0
      %p129 = por %p127, %p128
      %s130 = ssub.s32 %s12, %s19
      %p131 = scmp.eq.s32.totalorder %s130, 0
      %s133 = sadd.s32 %s132, 1
      %s134 = scalar_select %p131, %s132, %s133
      %p137 = pneg %p131
      %p138 = scmp.eq.s32.totalorder %s12, 3
      %p139 = por %p137, %p138
      %p140 = scmp.ne.s32.totalorder %s132, %s135
      %p141 = scmp.eq.s32.totalorder %s12, 0
      %p142 = por %p140, %p141
      %p143 = scmp.ne.s32.totalorder %s132, %s135
      %p144 = scmp.eq.s32.totalorder %s17, 3
      %p145 = por %p143, %p144
      %p146 = scmp.ne.s32.totalorder %s135, %s136
      %p147 = scmp.eq.s32.totalorder %s17, 0
      %p148 = por %p146, %p147
      %p149 = scmp.ne.s32.totalorder %s135, %s136
      %p150 = scmp.eq.s32.totalorder %s18, 3
      %p151 = por %p149, %p150
      %p153 = scmp.ne.s32.totalorder %s136, %s152
      %p154 = scmp.eq.s32.totalorder %s18, 0
      %p155 = por %p153, %p154
      %p156 = scmp.le.s32.totalorder 1, %s12
      %p157 = scmp.lt.s32.totalorder %s12, 5
      %p158 = pnand %p156, %p157
      %p159 = pneg %p158
      // Predicated region
      $region9: #{tpu_custom_call.1} parent=5 // pred_check
        _
      $region10: #{tpu_custom_call.1} parent=5 // pred_check_branch
        %161 = sbr.rel (%p158) target = $region12
      $region11: #{tpu_custom_call.1} parent=5 // pred_region
        %s162 = ssub.s32 %s12, 1
        // Predicated region
        $region13: #{tpu_custom_call.1} parent=11 // pred_check
          %p163 = pneg %p59
        $region14: #{tpu_custom_call.1} parent=11 // pred_check_branch
          %165 = sbr.rel (%p163) target = $region16
        $region15: #{tpu_custom_call.1} parent=11 // pred_region
          _
        $region16: #{tpu_custom_call.1} parent=11 // pred_fallthru
          _
        // Predicated region
        $region17: #{tpu_custom_call.1} parent=11 // pred_check
          %p166 = pneg %p80
        $region18: #{tpu_custom_call.1} parent=11 // pred_check_branch
          %168 = sbr.rel (%p166) target = $region20
        $region19: #{tpu_custom_call.1} parent=11 // pred_region
          _
        $region20: #{tpu_custom_call.1} parent=11 // pred_fallthru
          _
        // Predicated region
        $region21: #{tpu_custom_call.1} parent=11 // pred_check
          %p169 = pneg %p101
        $region22: #{tpu_custom_call.1} parent=11 // pred_check_branch
          %171 = sbr.rel (%p169) target = $region24
        $region23: #{tpu_custom_call.1} parent=11 // pred_region
          %s173 = ssub.s32 1024, 1024
          %174 = vsyncadd [#allocation3], %s173
          %s175 = sshll.u32 [#allocation2], 4
          %s176 = int_to_ptr.vmem [resolvable:$true] %s175
          %181 = dma.hbm_to_vmem [thread:$0]  %s3, 1024, %s176, [#allocation3], 64, 64, 4
        $region24: #{tpu_custom_call.1} parent=11 // pred_fallthru
          _
        // Predicated region
        $region25: #{tpu_custom_call.1} parent=11 // pred_check
          %p182 = pneg %p122
        $region26: #{tpu_custom_call.1} parent=11 // pred_check_branch
          %184 = sbr.rel (%p182) target = $region28
        $region27: #{tpu_custom_call.1} parent=11 // pred_region
          _
        $region28: #{tpu_custom_call.1} parent=11 // pred_fallthru
          _
      $region12: #{tpu_custom_call.1} parent=5 // pred_fallthru
        _
      %p185 = scmp.lt.s32.totalorder %s12, 4
      // Predicated region
      $region29: #{tpu_custom_call.1} parent=5 // pred_check
        %p186 = pneg %p185
      $region30: #{tpu_custom_call.1} parent=5 // pred_check_branch
        %188 = sbr.rel (%p186) target = $region32
      $region31: #{tpu_custom_call.1} parent=5 // pred_region
        // Predicated region
        $region33: #{tpu_custom_call.1} parent=31 // pred_check
          %p189 = pneg %p32
        $region34: #{tpu_custom_call.1} parent=31 // pred_check_branch
          %191 = sbr.rel (%p189) target = $region36
        $region35: #{tpu_custom_call.1} parent=31 // pred_region
          %s192 = smul.u32 2, %s12
          %p193 = scmp.lt.s32.totalorder %s192, 7
          %s194 = scalar_select %p193, %s192, 7
          %s195 = smul.addr %s194, 4
          %s196 = scalar_lea.vmem %s0, %s195
          %s197 = smul.u32 2, %s12
        $region36: #{tpu_custom_call.1} parent=31 // pred_fallthru
          _
      $region32: #{tpu_custom_call.1} parent=5 // pred_fallthru
        _
      %p198 = scmp.le.s32.totalorder 1, %s12
      %p199 = scmp.lt.s32.totalorder %s12, 5
      %p200 = pnand %p198, %p199
      %p201 = pneg %p200
      // Predicated region
      $region37: #{tpu_custom_call.1} parent=5 // pred_check
        _
      $region38: #{tpu_custom_call.1} parent=5 // pred_check_branch
        %203 = sbr.rel (%p200) target = $region40
      $region39: #{tpu_custom_call.1} parent=5 // pred_region
        %s204 = ssub.s32 %s12, 1
        // Predicated region
        $region41: #{tpu_custom_call.1} parent=39 // pred_check
          %p205 = pneg %p101
        $region42: #{tpu_custom_call.1} parent=39 // pred_check_branch
          %207 = sbr.rel (%p205) target = $region44
        $region43: #{tpu_custom_call.1} parent=39 // pred_region
          %208 = dma.done [#allocation3], 1024
        $region44: #{tpu_custom_call.1} parent=39 // pred_fallthru
          _
        %s209 = smul.u32 2, %s17
        %p210 = scmp.lt.s32.totalorder %s209, 7
        %s211 = scalar_select %p210, %s209, 7
        %s212 = smul.addr %s211, 4
        %s213 = scalar_lea.vmem %s0, %s212
        %p214 = pneg %p38
        %p215 = pneg %p35
        %p216 = pneg %p59
        %p217 = pneg %p56
        %p218 = pneg %p80
        %p219 = pneg %p77
        %p220 = pneg %p101
        %p221 = pneg %p98
        %p222 = pneg %p122
        %p223 = pneg %p119
        %p224 = pneg %p148
        %p225 = pneg %p145
        %s226 = smul.u32 2, %s17
        %p227 = scmp.lt.s32.totalorder %s226, 7
        %s228 = scalar_select %p227, %s226, 7
        %s229 = smul.addr %s228, 8
        %s230 = scalar_lea.vmem %s5, %s229
        %s231 = smul.u32 2, %s17
        %p232 = scmp.lt.s32.totalorder %s231, 7
        %s233 = scalar_select %p232, %s231, 7
        %s234 = smul.addr %s233, 4
        %s235 = scalar_lea.vmem %s0, %s234
        %s236 = smul.u32 2, %s17
        %s237 = smul.u32 2, %s17
        %p238 = scmp.lt.s32.totalorder %s237, 7
        %s239 = scalar_select %p238, %s237, 7
        %s240 = smul.addr %s239, 8
        %s241 = scalar_lea.vmem %s5, %s240
        %s242 = smul.u32 2, %s17
        %v244 = vld [vmem:[%s235] sm:$0xf]
        %v245 = vld [vmem:[%s235 + $0x4] sm:$0xf]
        %v246 = vld [vmem:[%s1] sm:$0xf]
        %v247 = vld [vmem:[%s1 + $0x4] sm:$0xf]
        %v248 = vld [vmem:[%s1 + $0x8] sm:$0xf]
        %v249 = vld [vmem:[%s1 + $0xc] sm:$0xf]
        %v250 = vld [vmem:[%s2] sm:$0x1]
        %v252 = vlaneseq
        %v253 = vshrl.u32 %v252, 7
        %v254 = vsub.s32 0, %v253
        %v255 = vrot.slane %v250, %v254
        %v259 = vunpack.c.l.b16 %v244
        %v260 = vunpack.c.l.b16 %v245
        %v261 = vpack.c.b16 %v260, %v259
        %v266 = vunpack.c.l.b16 %v246
        %v267 = vunpack.c.l.b16 %v247
        %v268 = vunpack.c.l.b16 %v248
        %v269 = vunpack.c.l.b16 %v249
        %v270 = vpack.c.b16 %v267, %v266
        %v271 = vpack.c.b16 %v269, %v268
        %vm274 = vcmask 261120
        %v276 = vsel %vm274, %v261, 0
        %278 = vmatprep.subr.bf16.mxu0 0
        %279 = vmatpush1.bf16.msra.mxu0 %v270
        %280 = vmatprep.subr.bf16.mxu0 0
        %281 = vmatpush1.bf16.msra.mxu0 %v271
        %282 = vmatprep.subr.bf16.mxu0 0
        %283 = vmatpush1.bf16.msra.mxu0 0
        %284 = vmatprep.subr.bf16.mxu0 0
        %285 = vmatpush1.bf16.msra.mxu0 0
        %286 = vmatprep.subr.bf16.mxu0 0
        %287 = vmatpush1.bf16.msra.mxu0 0
        %288 = vmatprep.subr.bf16.mxu0 0
        %289 = vmatpush1.bf16.msra.mxu0 0
        %290 = vmatprep.subr.bf16.mxu0 0
        %291 = vmatpush1.bf16.msra.mxu0 0
        %292 = vmatprep.subr.bf16.mxu0 0
        %293 = vmatpush1.bf16.msra.mxu0 0
        %294 = vmatprep.subr.bf16.mxu0 0
        %295 = vmatpush1.bf16.msra.mxu0 0
        %296 = vmatprep.subr.bf16.mxu0 0
        %297 = vmatpush1.bf16.msra.mxu0 0
        %298 = vmatprep.subr.bf16.mxu0 0
        %299 = vmatpush1.bf16.msra.mxu0 0
        %300 = vmatprep.subr.bf16.mxu0 0
        %301 = vmatpush1.bf16.msra.mxu0 0
        %302 = vmatprep.subr.bf16.mxu0 0
        %303 = vmatpush1.bf16.msra.mxu0 0
        %304 = vmatprep.subr.bf16.mxu0 0
        %305 = vmatpush1.bf16.msra.mxu0 0
        %306 = vmatprep.subr.bf16.mxu0 0
        %307 = vmatpush1.bf16.msra.mxu0 0
        %308 = vmatprep.subr.bf16.mxu0 0
        %309 = vmatpush1.bf16.msra.mxu0 0
        %310 = vmatprep.mubr.bf16.mxu0 0
        %311 = vmatmul.mubr.bf16.gmra.mrb[0].mxu0 %v276
        %v312 = vpop.f32.mrb[0].mxu0
        %v313 = vadd.f32 %v255, %v312
        %v314 = vpop.f32.mrb[0].mxu0
        %v315 = vpop.f32.mrb[0].mxu0
        %v316 = vadd.f32 %v255, %v315
        %v317 = vpop.f32.mrb[0].mxu0
        %318 = vdwg.mxu0
        %v319 = vmax.f32 %v313, 0.0
        %v320 = vmax.f32 %v316, 0.0
        %v321 = vpack.c.bf16 %v320, %v319
        %v322 = vld [vmem:[#allocation2] sm:$0xf]
        %v323 = vld [vmem:[#allocation2 + $0x4] sm:$0xf]
        %v324 = vld [vmem:[#allocation2 + $0x8] sm:$0xf]
        %v325 = vld [vmem:[#allocation2 + $0xc] sm:$0xf]
        %v326 = vld [vmem:[#allocation2 + $0x10] sm:$0xf]
        %v327 = vld [vmem:[#allocation2 + $0x14] sm:$0xf]
        %v328 = vld [vmem:[#allocation2 + $0x18] sm:$0xf]
        %v329 = vld [vmem:[#allocation2 + $0x1c] sm:$0xf]
        %v330 = vld [vmem:[#allocation2 + $0x20] sm:$0xf]
        %v331 = vld [vmem:[#allocation2 + $0x24] sm:$0xf]
        %v332 = vld [vmem:[#allocation2 + $0x28] sm:$0xf]
        %v333 = vld [vmem:[#allocation2 + $0x2c] sm:$0xf]
        %v334 = vld [vmem:[#allocation2 + $0x30] sm:$0xf]
        %v335 = vld [vmem:[#allocation2 + $0x34] sm:$0xf]
        %v336 = vld [vmem:[#allocation2 + $0x38] sm:$0xf]
        %v337 = vld [vmem:[#allocation2 + $0x3c] sm:$0xf]
        %v338 = vld [vmem:[%s4] sm:$0x1]
        %v340 = vlaneseq
        %v341 = vshrl.u32 %v340, 7
        %v342 = vsub.s32 0, %v341
        %v343 = vrot.slane %v338, %v342
        %v361 = vunpack.c.l.b16 %v322
        %v362 = vunpack.c.l.b16 %v323
        %v363 = vunpack.c.l.b16 %v324
        %v364 = vunpack.c.l.b16 %v325
        %v365 = vunpack.c.l.b16 %v326
        %v366 = vunpack.c.l.b16 %v327
        %v367 = vunpack.c.l.b16 %v328
        %v368 = vunpack.c.l.b16 %v329
        %v369 = vunpack.c.l.b16 %v330
        %v370 = vunpack.c.l.b16 %v331
        %v371 = vunpack.c.l.b16 %v332
        %v372 = vunpack.c.l.b16 %v333
        %v373 = vunpack.c.l.b16 %v334
        %v374 = vunpack.c.l.b16 %v335
        %v375 = vunpack.c.l.b16 %v336
        %v376 = vunpack.c.l.b16 %v337
        %v377 = vpack.c.b16 %v362, %v361
        %v378 = vpack.c.b16 %v364, %v363
        %v379 = vpack.c.b16 %v366, %v365
        %v380 = vpack.c.b16 %v368, %v367
        %v381 = vpack.c.b16 %v370, %v369
        %v382 = vpack.c.b16 %v372, %v371
        %v383 = vpack.c.b16 %v374, %v373
        %v384 = vpack.c.b16 %v376, %v375
        %393 = vmatprep.subr.bf16.mxu0 0
        %394 = vmatpush1.bf16.msra.mxu0 %v377
        %395 = vmatprep.subr.bf16.mxu0 0
        %396 = vmatpush1.bf16.msra.mxu0 %v378
        %397 = vmatprep.subr.bf16.mxu0 0
        %398 = vmatpush1.bf16.msra.mxu0 %v379
        %399 = vmatprep.subr.bf16.mxu0 0
        %400 = vmatpush1.bf16.msra.mxu0 %v380
        %401 = vmatprep.subr.bf16.mxu0 0
        %402 = vmatpush1.bf16.msra.mxu0 %v381
        %403 = vmatprep.subr.bf16.mxu0 0
        %404 = vmatpush1.bf16.msra.mxu0 %v382
        %405 = vmatprep.subr.bf16.mxu0 0
        %406 = vmatpush1.bf16.msra.mxu0 %v383
        %407 = vmatprep.subr.bf16.mxu0 0
        %408 = vmatpush1.bf16.msra.mxu0 %v384
        %409 = vmatprep.subr.bf16.mxu0 0
        %410 = vmatpush1.bf16.msra.mxu0 0
        %411 = vmatprep.subr.bf16.mxu0 0
        %412 = vmatpush1.bf16.msra.mxu0 0
        %413 = vmatprep.subr.bf16.mxu0 0
        %414 = vmatpush1.bf16.msra.mxu0 0
        %415 = vmatprep.subr.bf16.mxu0 0
        %416 = vmatpush1.bf16.msra.mxu0 0
        %417 = vmatprep.subr.bf16.mxu0 0
        %418 = vmatpush1.bf16.msra.mxu0 0
        %419 = vmatprep.subr.bf16.mxu0 0
        %420 = vmatpush1.bf16.msra.mxu0 0
        %421 = vmatprep.subr.bf16.mxu0 0
        %422 = vmatpush1.bf16.msra.mxu0 0
        %423 = vmatprep.subr.bf16.mxu0 0
        %424 = vmatpush1.bf16.msra.mxu0 0
        %425 = vmatprep.mubr.bf16.mxu0 0
        %426 = vmatmul.mubr.bf16.gmra.mrb[0].mxu0 %v321
        %v427 = vpop.f32.mrb[0].mxu0
        %v428 = vadd.f32 %v343, %v427
        %v429 = vpop.f32.mrb[0].mxu0
        %v430 = vpop.f32.mrb[0].mxu0
        %v431 = vadd.f32 %v343, %v430
        %v432 = vpop.f32.mrb[0].mxu0
        %433 = vdwg.mxu0
        %434 = vmax.xlane.f32.xlu0 %v428
        %v435 = vpop.xlane.xlu0 %434
        %436 = vmax.xlane.f32.xlu0 %v431
        %v437 = vpop.xlane.xlu0 %436
        %v438 = vsub.f32 %v428, %v435
        %v439 = vsub.f32 %v431, %v437
        %v440 = vmul.f32 %v438, 1.442695
        %v441 = vpow.pop %v440
        %v442 = vmul.f32 %v439, 1.442695
        %v443 = vpow.pop %v442
        %444 = vadd.xlane.f32.xlu0 %v441
        %v445 = vpop.xlane.xlu0 %444
        %446 = vadd.xlane.f32.xlu0 %v443
        %v447 = vpop.xlane.xlu0 %446
        %v448 = vrcp.pop %v445
        %v449 = vmul.f32 %v441, %v448
        %v450 = vrcp.pop %v447
        %v451 = vmul.f32 %v443, %v450
        %vm452 = vcmask 64512
        %453 = vst.msk [vmem:[%s241] sm:$0xff] %vm452, %v449
        %454 = vst.msk [vmem:[%s241 + $0x8] sm:$0xff] %vm452, %v451
        %s455 = smul.u32 2, %s17
        %p456 = scmp.lt.s32.totalorder %s455, 7
        %s457 = scalar_select %p456, %s455, 7
        %s458 = smul.addr %s457, 8
        %s459 = scalar_lea.vmem %s5, %s458
        // Predicated region
        $region45: #{tpu_custom_call.1} parent=39 // pred_check
          %p460 = pneg %p145
        $region46: #{tpu_custom_call.1} parent=39 // pred_check_branch
          %462 = sbr.rel (%p460) target = $region48
        $region47: #{tpu_custom_call.1} parent=39 // pred_region
          %s463 = smul.u32 2, %s17
        $region48: #{tpu_custom_call.1} parent=39 // pred_fallthru
          _
      $region40: #{tpu_custom_call.1} parent=5 // pred_fallthru
        _
      %p464 = scmp.le.s32.totalorder 2, %s12
      // Predicated region
      $region49: #{tpu_custom_call.1} parent=5 // pred_check
        %p465 = pneg %p464
      $region50: #{tpu_custom_call.1} parent=5 // pred_check_branch
        %467 = sbr.rel (%p465) target = $region52
      $region51: #{tpu_custom_call.1} parent=5 // pred_region
        %s468 = ssub.s32 %s12, 2
        // Predicated region
        $region53: #{tpu_custom_call.1} parent=51 // pred_check
          %p469 = pneg %p151
        $region54: #{tpu_custom_call.1} parent=51 // pred_check_branch
          %471 = sbr.rel (%p469) target = $region56
        $region55: #{tpu_custom_call.1} parent=51 // pred_region
          %s472 = smul.u32 2, %s18
          %p473 = scmp.lt.s32.totalorder %s472, 7
          %s474 = scalar_select %p473, %s472, 7
          %s475 = smul.addr %s474, 8
          %s476 = scalar_lea.vmem %s5, %s475
        $region56: #{tpu_custom_call.1} parent=51 // pred_fallthru
          _
      $region52: #{tpu_custom_call.1} parent=5 // pred_fallthru
        _
    $region6: #{tpu_custom_call.1} parent=1 // loop_footer
      %s16 = sadd.s32 1, %s12
    $region7: #{tpu_custom_call.1} parent=1 // loop_footer_branch
      %11 = sbr.rel target = $region3
    $region8: #{tpu_custom_call.1} parent=1 // loop_exit
      _
    %477 = vsyncpa [#allocation3], 1
    %s478 = scalar_lea.sflag [#allocation3], 1
    %479 = vsyncpa %s478, 1

</llo_original>
